<compile_context>
chip_gen: v7x
topology: tpu7x:2x2x1
jax: 0.10.0
libtpu: 0.0.40
codegen_flags: <defaults>
</compile_context>

<pallas_src>
import jax
import jax.numpy as jnp
import numpy as np
from jax.experimental import pallas as pl
from jax.experimental.pallas import tpu as pltpu

VISCOSITY = 1.0e-4

# VMEM sizing: ~2x double-buffered (u in, out) + ~6 in-kernel f32 temporaries.
_VMEM_LIMIT_BYTES = 32 * 1024 * 1024      # explicit; safe on v5e/v6e/v7x
_VMEM_TILE_BUDGET = 26 * 1024 * 1024      # leave headroom under the limit
_LIVE_F32_PER_ELEM = 10


# ----------------------------------------------------------------------------
# Parameter setup (glue, numpy float64): periodic 3-point stencil coefficients.
# ----------------------------------------------------------------------------
def build_periodic_stencil_coeffs(x_vector, period):
    """Returns an (8, N) float32 coefficient slab.

    rows 0..2 : a1, b1, c1   first derivative  (a1*u[i-1] + b1*u[i] + c1*u[i+1])
    rows 3..5 : a2, b2, c2   second derivative, pre-scaled by VISCOSITY
    rows 6..7 : zero padding (sublane alignment)
    """
    x = np.asarray(x_vector, dtype=np.float64)
    n = x.shape[0]
    xp = np.roll(x, -1)
    xm = np.roll(x, 1)
    hp = (xp - x) % period          # spacing to the right neighbor (periodic wrap)
    hm = (x - xm) % period          # spacing to the left neighbor  (periodic wrap)
    assert np.all(hp > 0.0) and np.all(hm > 0.0), "degenerate grid spacing"

    a1 = -hp / (hm * (hm + hp))
    b1 = (hp - hm) / (hm * hp)
    c1 = hm / (hp * (hm + hp))
    # Folding VISCOSITY here (in f64) changes rounding order vs. computing
    # D2(u) then scaling by 1e-4; the difference is far below the f32 floor.
    a2 = 2.0 / (hm * (hm + hp)) * VISCOSITY
    b2 = -2.0 / (hm * hp) * VISCOSITY
    c2 = 2.0 / (hp * (hm + hp)) * VISCOSITY

    coef = np.zeros((8, n), dtype=np.float64)
    coef[0], coef[1], coef[2] = a1, b1, c1
    coef[3], coef[4], coef[5] = a2, b2, c2
    return jnp.asarray(coef, dtype=jnp.float32)


# ----------------------------------------------------------------------------
# Tile selection: largest (tb, tn) that fits the VMEM budget, >= 2 grid steps.
# ----------------------------------------------------------------------------
def _choose_tiles(B, N):
    def fits(tb, tn):
        per_step = (_LIVE_F32_PER_ELEM * tb * tn + 2 * 8 * tn + 2 * tb * 2) * 4
        return per_step <= _VMEM_TILE_BUDGET

    def can_halve_b(tb):
        return tb % 2 == 0 and tb // 2 >= 8

    def can_halve_n(tn):
        return tn % 2 == 0 and (tn // 2) % 128 == 0

    tb, tn = B, N
    # Shrink to the VMEM budget; keep the largest tile that fits (prefer
    # halving the larger axis so tiles stay big along both dims).
    while not fits(tb, tn):
        if can_halve_b(tb) and (tb >= tn or not can_halve_n(tn)):
            tb //= 2
        elif can_halve_n(tn):
            tn //= 2
        elif can_halve_b(tb):
            tb //= 2
        else:
            break

    # Guarantee >= 2 grid steps when the shape allows (v7x dual TensorCore;
    # also enables DMA/compute overlap on v5e/v6e).
    if (B // tb) * (N // tn) < 2:
        if can_halve_b(tb):
            tb //= 2
        elif can_halve_n(tn):
            tn //= 2
    return tb, tn


# ----------------------------------------------------------------------------
# Pallas kernel: fused periodic stencil + Burgers RHS combine.
# ----------------------------------------------------------------------------
def _burgers_kernel(u_ref, coef_ref, halo_ref, o_ref):
    u = u_ref[...]                                   # (tb, tn)
    tb, tn = u.shape
    coef = coef_ref[...]                             # (8, tn)
    a1, b1, c1 = coef[0:1, :], coef[1:2, :], coef[2:3, :]
    a2, b2, c2 = coef[3:4, :], coef[4:5, :], coef[5:6, :]

    # Periodic neighbors: in-tile roll (XLU), then the wrap columns are
    # patched with the per-tile halo columns supplied by the wrapper.
    left = jnp.broadcast_to(halo_ref[:, 0:1], (tb, tn))   # u[:, tile_start-1]
    right = jnp.broadcast_to(halo_ref[:, 1:2], (tb, tn))  # u[:, tile_end]
    lane = jax.lax.broadcasted_iota(jnp.int32, (tb, tn), 1)
    um = jnp.where(lane == 0, left, pltpu.roll(u, 1, axis=1))              # u[i-1]
    up = jnp.where(lane == tn - 1, right, pltpu.roll(u, tn - 1, axis=1))   # u[i+1]

    du = a1 * um + b1 * u + c1 * up                  # D1(u)
    d2u_nu = a2 * um + b2 * u + c2 * up              # VISCOSITY * D2(u)
    o_ref[...] = (-(u + 0.5) * du + d2u_nu).astype(o_ref.dtype)


def _burgers_rhs_tiled(u, coef):
    """u: (B, N) f32 with B % 8 == 0, N % 128 == 0; coef: (8, N) f32."""
    B, N = u.shape
    tb, tn = _choose_tiles(B, N)
    gb, gn = B // tb, N // tn

    # Per-tile periodic halo columns:
    #   halo[j, :, 0] = u[:, (j*tn - 1) mod N]   (left neighbor of the tile)
    #   halo[j, :, 1] = u[:, ((j+1)*tn) mod N]   (right neighbor of the tile)
    starts = np.arange(gn) * tn
    left_cols = (starts - 1) % N
    right_cols = (starts + tn) % N
    halo = jnp.stack([u[:, left_cols], u[:, right_cols]], axis=-1)   # (B, gn, 2)
    halo = jnp.transpose(halo, (1, 0, 2))                            # (gn, B, 2)

    cost = pl.CostEstimate(
        flops=16 * B * N,
        transcendentals=0,
        bytes_accessed=(2 * B * N + gb * 8 * N + gn * B * 2) * 4,
    )

    return pl.pallas_call(
        _burgers_kernel,
        out_shape=jax.ShapeDtypeStruct((B, N), jnp.float32),
        grid=(gb, gn),
        in_specs=[
            pl.BlockSpec((tb, tn), lambda i, j: (i, j)),            # u tile
            pl.BlockSpec((8, tn), lambda i, j: (0, j)),             # coefficients
            pl.BlockSpec((None, tb, 2), lambda i, j: (j, i, 0)),    # halo columns
        ],
        out_specs=pl.BlockSpec((tb, tn), lambda i, j: (i, j)),
        compiler_params=pltpu.CompilerParams(
            dimension_semantics=("parallel", "parallel"),
            vmem_limit_bytes=_VMEM_LIMIT_BYTES),
        cost_estimate=cost,
    )(u, coef, halo)


def burgers_rhs(u, coef):
    """Burgers RHS: -(u + 0.5) * D1(u) + VISCOSITY * D2(u).

    u: (N,) or (B, N) float32 with N % 128 == 0; coef from
    build_periodic_stencil_coeffs.  Batch is zero-padded to a multiple of 8.
    """
    u = jnp.asarray(u, jnp.float32)
    squeeze = u.ndim == 1
    if squeeze:
        u = u[None, :]
    B, N = u.shape
    assert N % 128 == 0, "N must be a multiple of 128 (lane-aligned tiles)"
    pad = (-B) % 8
    if pad:
        u = jnp.concatenate([u, jnp.zeros((pad, N), u.dtype)], axis=0)
    out = _burgers_rhs_tiled(u, coef)
    if pad:
        out = out[:B]
    if squeeze:
        out = out[0]
    return out


class Burgers:
    """JAX/Pallas counterpart of the PyTorch Burgers module."""

    def __init__(self, x_vector, period):
        self.coef = build_periodic_stencil_coeffs(x_vector, period)

    def forward(self, t, u):
        del t
        return burgers_rhs(u, self.coef)

    __call__ = forward

    def observe(self, u):
        return u


# ----------------------------------------------------------------------------
# References for correctness checks.
# ----------------------------------------------------------------------------
def burgers_rhs_dense_f64(u_np, x_vector, period):
    """Original module semantics: dense periodic derivative matrices, float64."""
    x = np.asarray(x_vector, dtype=np.float64)
    n = x.shape[0]
    xp = np.roll(x, -1)
    xm = np.roll(x, 1)
    hp = (xp - x) % period
    hm = (x - xm) % period

    a1 = -hp / (hm * (hm + hp))
    b1 = (hp - hm) / (hm * hp)
    c1 = hm / (hp * (hm + hp))
    a2 = 2.0 / (hm * (hm + hp))
    b2 = -2.0 / (hm * hp)
    c2 = 2.0 / (hp * (hm + hp))

    rows = np.arange(n)
    left = (rows - 1) % n
    right = (rows + 1) % n
    d1 = np.zeros((n, n))
    d2 = np.zeros((n, n))
    d1[rows, left] += a1; d1[rows, rows] += b1; d1[rows, right] += c1
    d2[rows, left] += a2; d2[rows, rows] += b2; d2[rows, right] += c2

    u64 = np.asarray(u_np, dtype=np.float64)
    du = u64 @ d1.T
    d2u = u64 @ d2.T
    return -(u64 + 0.5) * du + VISCOSITY * d2u


def burgers_rhs_stencil_ref(u, coef):
    """Same f32 stencil arithmetic with jnp.roll (validates roll + halo path)."""
    um = jnp.roll(u, 1, axis=1)
    up = jnp.roll(u, -1, axis=1)
    a1, b1, c1 = coef[0:1, :], coef[1:2, :], coef[2:3, :]
    a2, b2, c2 = coef[3:4, :], coef[4:5, :], coef[5:6, :]
    du = a1 * um + b1 * u + c1 * up
    d2u_nu = a2 * um + b2 * u + c2 * up
    return -(u + 0.5) * du + d2u_nu


if __name__ == "__main__":
    B, N = 8, 256                       # small demo; tiling gives grid (1, 2)
    L = 2.0 * np.pi                     # periodic domain length
    # Mildly nonuniform, strictly increasing periodic grid (operators are
    # "Unstructure", so exercise the general coefficient path).
    base = np.linspace(0.0, L, N, endpoint=False)
    x_vector = base + 0.3 * (L / N) * np.sin(7.0 * base)

    model = Burgers(x_vector, period=L)

    key = jax.random.PRNGKey(0)
    k1, k2 = jax.random.split(key)
    phases = jax.random.uniform(k1, (B, 1), minval=0.0, maxval=2.0 * np.pi)
    noise = 0.1 * jax.random.normal(k2, (B, N))
    x32 = jnp.asarray(x_vector, jnp.float32)
    u = (jnp.sin(x32[None, :] + phases) + noise).astype(jnp.float32)

    out = jax.block_until_ready(model.forward(0.0, u))
    out_np = np.asarray(out)

    # Check 1: against the original module's dense-matrix formulation (float64).
    ref64 = burgers_rhs_dense_f64(np.asarray(u), x_vector, period=L)
    np.testing.assert_allclose(out_np, ref64, rtol=1e-4, atol=1e-4)

    # Check 2: against the identical f32 stencil computed with jnp.roll
    # (validates the in-tile roll + periodic halo machinery).
    ref32 = np.asarray(burgers_rhs_stencil_ref(u, model.coef))
    np.testing.assert_allclose(out_np, ref32, rtol=1e-5, atol=1e-5)

    # Check 3: 1-D state (the PyTorch B == 1 case) via the batch-padding path.
    out_row = jax.block_until_ready(model.forward(0.0, u[0]))
    np.testing.assert_allclose(np.asarray(out_row), out_np[0], rtol=1e-6, atol=1e-6)

    print("KERNEL_OK")
</pallas_src>

<mosaic_0001>
module attributes {stable_mosaic.version = 11 : i64} {
  func.func @_burgers_kernel(%arg0: i32, %arg1: i32, %arg2: memref<8x128xf32, #tpu.memory_space<vmem>>, %arg3: memref<8x128xf32, #tpu.memory_space<vmem>>, %arg4: memref<1x8x2xf32, #tpu.memory_space<vmem>>, %arg5: memref<8x128xf32, #tpu.memory_space<vmem>>) attributes {dimension_semantics = [#tpu.dimension_semantics<parallel>, #tpu.dimension_semantics<parallel>], iteration_bounds = array<i64: 1, 2>, scalar_prefetch = 0 : i64, scratch_operands = 0 : i64, tpu.core_type = #tpu.core_type<tc>, window_params = [{transform_indices = @transform_0, window_bounds = array<i64: 8, 128>}, {transform_indices = @transform_1, window_bounds = array<i64: 8, 128>}, {transform_indices = @transform_2, window_bounds = array<i64: 1, 8, 2>}, {transform_indices = @transform_3, window_bounds = array<i64: 8, 128>}]} {
    %c0 = arith.constant 0 : index
    %c0_0 = arith.constant 0 : index
    %0 = vector.load %arg2[%c0, %c0_0] : memref<8x128xf32, #tpu.memory_space<vmem>>, vector<8x128xf32>
    %c0_1 = arith.constant 0 : index
    %c0_2 = arith.constant 0 : index
    %1 = vector.load %arg3[%c0_1, %c0_2] : memref<8x128xf32, #tpu.memory_space<vmem>>, vector<8x128xf32>
    %2 = vector.extract_strided_slice %1 {offsets = [0, 0], sizes = [1, 128], strides = [1, 1]} : vector<8x128xf32> to vector<1x128xf32>
    %3 = vector.extract_strided_slice %1 {offsets = [1, 0], sizes = [1, 128], strides = [1, 1]} : vector<8x128xf32> to vector<1x128xf32>
    %4 = vector.extract_strided_slice %1 {offsets = [2, 0], sizes = [1, 128], strides = [1, 1]} : vector<8x128xf32> to vector<1x128xf32>
    %5 = vector.extract_strided_slice %1 {offsets = [3, 0], sizes = [1, 128], strides = [1, 1]} : vector<8x128xf32> to vector<1x128xf32>
    %6 = vector.extract_strided_slice %1 {offsets = [4, 0], sizes = [1, 128], strides = [1, 1]} : vector<8x128xf32> to vector<1x128xf32>
    %7 = vector.extract_strided_slice %1 {offsets = [5, 0], sizes = [1, 128], strides = [1, 1]} : vector<8x128xf32> to vector<1x128xf32>
    %c0_3 = arith.constant 0 : index
    %c0_4 = arith.constant 0 : index
    %c0_5 = arith.constant 0 : index
    %8 = vector.load %arg4[%c0_3, %c0_4, %c0_5] : memref<1x8x2xf32, #tpu.memory_space<vmem>>, vector<1x8x1xf32>
    %9 = vector.shape_cast %8 : vector<1x8x1xf32> to vector<8x1xf32>
    %10 = vector.shape_cast %9 : vector<8x1xf32> to vector<8x1xf32>
    %11 = vector.broadcast %10 : vector<8x1xf32> to vector<8x128xf32>
    %c0_6 = arith.constant 0 : index
    %c0_7 = arith.constant 0 : index
    %c1 = arith.constant 1 : index
    %12 = vector.load %arg4[%c0_6, %c0_7, %c1] : memref<1x8x2xf32, #tpu.memory_space<vmem>>, vector<1x8x1xf32>
    %13 = vector.shape_cast %12 : vector<1x8x1xf32> to vector<8x1xf32>
    %14 = vector.shape_cast %13 : vector<8x1xf32> to vector<8x1xf32>
    %15 = vector.broadcast %14 : vector<8x1xf32> to vector<8x128xf32>
    %16 = tpu.iota {dimensions = array<i32: 1>} : vector<8x128xi32>
    %c0_i32 = arith.constant 0 : i32
    %17 = vector.broadcast %c0_i32 : i32 to vector<8x128xi32>
    %18 = arith.cmpi eq, %16, %17 : vector<8x128xi32>
    %c1_i32 = arith.constant 1 : i32
    %19 = tpu.dynamic_rotate %0 by %c1_i32 dim 1 : vector<8x128xf32>, i32 -> vector<8x128xf32>
    %20 = arith.select %18, %11, %19 : vector<8x128xi1>, vector<8x128xf32>
    %c127_i32 = arith.constant 127 : i32
    %21 = vector.broadcast %c127_i32 : i32 to vector<8x128xi32>
    %22 = arith.cmpi eq, %16, %21 : vector<8x128xi32>
    %c127_i32_8 = arith.constant 127 : i32
    %23 = tpu.dynamic_rotate %0 by %c127_i32_8 dim 1 : vector<8x128xf32>, i32 -> vector<8x128xf32>
    %24 = arith.select %22, %15, %23 : vector<8x128xi1>, vector<8x128xf32>
    %25 = vector.broadcast %2 : vector<1x128xf32> to vector<8x128xf32>
    %26 = arith.mulf %25, %20 : vector<8x128xf32>
    %27 = vector.broadcast %3 : vector<1x128xf32> to vector<8x128xf32>
    %28 = arith.mulf %27, %0 : vector<8x128xf32>
    %29 = arith.addf %26, %28 : vector<8x128xf32>
    %30 = vector.broadcast %4 : vector<1x128xf32> to vector<8x128xf32>
    %31 = arith.mulf %30, %24 : vector<8x128xf32>
    %32 = arith.addf %29, %31 : vector<8x128xf32>
    %33 = vector.broadcast %5 : vector<1x128xf32> to vector<8x128xf32>
    %34 = arith.mulf %33, %20 : vector<8x128xf32>
    %35 = vector.broadcast %6 : vector<1x128xf32> to vector<8x128xf32>
    %36 = arith.mulf %35, %0 : vector<8x128xf32>
    %37 = arith.addf %34, %36 : vector<8x128xf32>
    %38 = vector.broadcast %7 : vector<1x128xf32> to vector<8x128xf32>
    %39 = arith.mulf %38, %24 : vector<8x128xf32>
    %40 = arith.addf %37, %39 : vector<8x128xf32>
    %cst = arith.constant 5.000000e-01 : f32
    %41 = vector.broadcast %cst : f32 to vector<8x128xf32>
    %42 = arith.addf %0, %41 : vector<8x128xf32>
    %cst_9 = arith.constant 0.000000e+00 : f32
    %43 = vector.broadcast %cst_9 : f32 to vector<8x128xf32>
    %44 = arith.subf %43, %42 : vector<8x128xf32>
    %45 = arith.mulf %44, %32 : vector<8x128xf32>
    %46 = arith.addf %45, %40 : vector<8x128xf32>
    %c0_10 = arith.constant 0 : index
    %c0_11 = arith.constant 0 : index
    %47 = vector.load %arg5[%c0_10, %c0_11] : memref<8x128xf32, #tpu.memory_space<vmem>>, vector<8x128xf32>
    tpu.vector_store %arg5[%c0_10, %c0_11], %46 {strides = array<i32>} : memref<8x128xf32, #tpu.memory_space<vmem>>, vector<8x128xf32>,
    return
  }
  func.func @transform_0(%arg0: i32, %arg1: i32) -> (i32, i32) {
    %c0_i32 = arith.constant 0 : i32
    return %arg0, %arg1 : i32, i32
  }
  func.func @transform_1(%arg0: i32, %arg1: i32) -> (i32, i32) {
    %c0_i32 = arith.constant 0 : i32
    %c0_i32_0 = arith.constant 0 : i32
    return %c0_i32, %arg1 : i32, i32
  }
  func.func @transform_2(%arg0: i32, %arg1: i32) -> (i32, i32, i32) {
    %c0_i32 = arith.constant 0 : i32
    %c0_i32_0 = arith.constant 0 : i32
    return %arg1, %arg0, %c0_i32 : i32, i32, i32
  }
  func.func @transform_3(%arg0: i32, %arg1: i32) -> (i32, i32) {
    %c0_i32 = arith.constant 0 : i32
    return %arg0, %arg1 : i32, i32
  }
}

</mosaic_0001>

<llo_original>
// kernel: tpu_custom_call.1
$region0: #{tpu_custom_call.1}
  #allocation0 [shape = 'u32[]', space=smem, size = 0x4, offset = 0x4, fixed_abs, tag = 'smem constant byte address 0x4 - core index']
  #allocation1 [shape = 'u32[144,128]{1,0:T(1,128)}', space=vmem, size = 0x12000, scoped, tag = 'internal scratch']
  %s0 = inlined_call_operand.vmem [shape: f32[8,256], index: 0, kind: input, shape index: {}]
  %s1 = inlined_call_operand.hbm [shape: f32[8,256], index: 1, kind: input, shape index: {}]
  %s2 = inlined_call_operand.vmem [shape: f32[2,8,2], index: 2, kind: input, shape index: {}]
  %s3 = inlined_call_operand.hbm [shape: f32[8,256], index: 3, kind: output, shape index: {}]
  %s4 = sld [smem:[#allocation0]]
  $region49: #{tpu_custom_call.1} parent=0
    _
  %s6 = ssub.s32 1, %s4
  %s7 = scalar_select 0, %s6, %s4
  $region1: #{tpu_custom_call.1} parent=0
    #allocation2 [shape = 'u8[8192]{0}', space=vmem, size = 0x2000, scoped, tag = 'input window, operand 1']
    #allocation3 [shape = 's32[2]{0}', space=sflag, size = 0x8, scoped, tag = 'scoped memory for tpu_custom_call.1']
    #allocation4 [shape = 's32[2]{0}', space=sflag, size = 0x8, scoped, tag = 'scoped memory for tpu_custom_call.1']
    #allocation5 [shape = 'u8[8192]{0}', space=vmem, size = 0x2000, scoped, tag = 'output window, operand 0']
    %8 = vsyncpa [#allocation3], 0
    %s9 = scalar_lea.sflag [#allocation3], 1
    %10 = vsyncpa %s9, 0
    %11 = vsyncpa [#allocation4], 0
    %s12 = scalar_lea.sflag [#allocation4], 1
    %13 = vsyncpa %s12, 0
    loop: start=0, step=1, limit=4
    $region2: #{tpu_custom_call.1} parent=1 // loop_pre_header
      _
    $region3: #{tpu_custom_call.1} parent=1 // loop_header
      %s15 = sphi 0, %s19
      %p16 = scmp.ge.s32.totalorder %s15, 4
      %s22 = sphi 0, %s34
      %s23 = sphi 0, %s30
      %s24 = sphi 0, %s22
      %s25 = sphi 0, %s23
      %s26 = sphi 0, %s24
      %s27 = sphi 0, %s25
      %s39 = sphi 0, %s41
      %s42 = sphi 0, %s39
      %s43 = sphi 0, %s42
      %s59 = sphi 0, %s43
      %s65 = sphi 0, %s67
      %s68 = sphi 0, %s65
      %s69 = sphi 0, %s68
      %s85 = sphi 0, %s69
      %s93 = sphi 0, %s95
      %s96 = sphi 0, %s93
      %s97 = sphi 0, %s96
      %s113 = sphi 0, %s97
      %s121 = sphi 0, %s123
      %s124 = sphi 0, %s121
      %s125 = sphi 0, %s124
      %s141 = sphi 0, %s125
    $region4: #{tpu_custom_call.1} parent=1 // loop_header_branch
      %18 = sbr.rel (%p16) target = $region8
    $region5: #{tpu_custom_call.1} parent=1 // loop_body
      %s20 = ssub.s32 %s15, 1
      %s21 = ssub.s32 %s15, 2
      %s28 = sadd.s32 1, %s23
      %p29 = scmp.ge.s32.totalorder %s28, 2
      %s30 = scalar_select %p29, 0, %s28
      %s31 = sadd.s32 1, %s22
      %s32 = scalar_select %p29, %s31, %s22
      %p33 = scmp.ge.s32.totalorder %s32, 1
      %s34 = scalar_select %p33, 0, %s32
      %s35 = ssub.s32 %s22, %s34
      %s36 = ssub.s32 %s23, %s30
      %s37 = sor.u32 %s35, %s36
      %p38 = scmp.eq.s32.totalorder %s37, 0
      %s40 = sadd.s32 %s39, 1
      %s41 = scalar_select %p38, %s39, %s40
      %p44 = pneg %p38
      %p45 = scmp.eq.s32.totalorder %s15, 1
      %p46 = por %p44, %p45
      %p47 = scmp.ne.s32.totalorder %s39, %s42
      %p48 = scmp.eq.s32.totalorder %s15, 0
      %p49 = por %p47, %p48
      %p50 = scmp.ne.s32.totalorder %s39, %s42
      %p51 = scmp.eq.s32.totalorder %s20, 1
      %p52 = por %p50, %p51
      %p53 = scmp.ne.s32.totalorder %s42, %s43
      %p54 = scmp.eq.s32.totalorder %s20, 0
      %p55 = por %p53, %p54
      %p56 = scmp.ne.s32.totalorder %s42, %s43
      %p57 = scmp.eq.s32.totalorder %s21, 1
      %p58 = por %p56, %p57
      %p60 = scmp.ne.s32.totalorder %s43, %s59
      %p61 = scmp.eq.s32.totalorder %s21, 0
      %p62 = por %p60, %p61
      %s63 = ssub.s32 %s23, %s30
      %p64 = scmp.eq.s32.totalorder %s63, 0
      %s66 = sadd.s32 %s65, 1
      %s67 = scalar_select %p64, %s65, %s66
      %p70 = pneg %p64
      %p71 = scmp.eq.s32.totalorder %s15, 1
      %p72 = por %p70, %p71
      %p73 = scmp.ne.s32.totalorder %s65, %s68
      %p74 = scmp.eq.s32.totalorder %s15, 0
      %p75 = por %p73, %p74
      %p76 = scmp.ne.s32.totalorder %s65, %s68
      %p77 = scmp.eq.s32.totalorder %s20, 1
      %p78 = por %p76, %p77
      %p79 = scmp.ne.s32.totalorder %s68, %s69
      %p80 = scmp.eq.s32.totalorder %s20, 0
      %p81 = por %p79, %p80
      %p82 = scmp.ne.s32.totalorder %s68, %s69
      %p83 = scmp.eq.s32.totalorder %s21, 1
      %p84 = por %p82, %p83
      %p86 = scmp.ne.s32.totalorder %s69, %s85
      %p87 = scmp.eq.s32.totalorder %s21, 0
      %p88 = por %p86, %p87
      %s89 = ssub.s32 %s23, %s30
      %s90 = ssub.s32 %s22, %s34
      %s91 = sor.u32 %s89, %s90
      %p92 = scmp.eq.s32.totalorder %s91, 0
      %s94 = sadd.s32 %s93, 1
      %s95 = scalar_select %p92, %s93, %s94
      %p98 = pneg %p92
      %p99 = scmp.eq.s32.totalorder %s15, 1
      %p100 = por %p98, %p99
      %p101 = scmp.ne.s32.totalorder %s93, %s96
      %p102 = scmp.eq.s32.totalorder %s15, 0
      %p103 = por %p101, %p102
      %p104 = scmp.ne.s32.totalorder %s93, %s96
      %p105 = scmp.eq.s32.totalorder %s20, 1
      %p106 = por %p104, %p105
      %p107 = scmp.ne.s32.totalorder %s96, %s97
      %p108 = scmp.eq.s32.totalorder %s20, 0
      %p109 = por %p107, %p108
      %p110 = scmp.ne.s32.totalorder %s96, %s97
      %p111 = scmp.eq.s32.totalorder %s21, 1
      %p112 = por %p110, %p111
      %p114 = scmp.ne.s32.totalorder %s97, %s113
      %p115 = scmp.eq.s32.totalorder %s21, 0
      %p116 = por %p114, %p115
      %s117 = ssub.s32 %s22, %s34
      %s118 = ssub.s32 %s23, %s30
      %s119 = sor.u32 %s117, %s118
      %p120 = scmp.eq.s32.totalorder %s119, 0
      %s122 = sadd.s32 %s121, 1
      %s123 = scalar_select %p120, %s121, %s122
      %p126 = pneg %p120
      %p127 = scmp.eq.s32.totalorder %s15, 1
      %p128 = por %p126, %p127
      %p129 = scmp.ne.s32.totalorder %s121, %s124
      %p130 = scmp.eq.s32.totalorder %s15, 0
      %p131 = por %p129, %p130
      %p132 = scmp.ne.s32.totalorder %s121, %s124
      %p133 = scmp.eq.s32.totalorder %s20, 1
      %p134 = por %p132, %p133
      %p135 = scmp.ne.s32.totalorder %s124, %s125
      %p136 = scmp.eq.s32.totalorder %s20, 0
      %p137 = por %p135, %p136
      %p138 = scmp.ne.s32.totalorder %s124, %s125
      %p139 = scmp.eq.s32.totalorder %s21, 1
      %p140 = por %p138, %p139
      %p142 = scmp.ne.s32.totalorder %s125, %s141
      %p143 = scmp.eq.s32.totalorder %s21, 0
      %p144 = por %p142, %p143
      %p145 = scmp.le.s32.totalorder 1, %s15
      %p146 = scmp.lt.s32.totalorder %s15, 3
      %p147 = pnand %p145, %p146
      %p148 = pneg %p147
      // Predicated region
      $region9: #{tpu_custom_call.1} parent=5 // pred_check
        _
      $region10: #{tpu_custom_call.1} parent=5 // pred_check_branch
        %150 = sbr.rel (%p147) target = $region12
      $region11: #{tpu_custom_call.1} parent=5 // pred_region
        %s151 = ssub.s32 %s15, 1
      $region12: #{tpu_custom_call.1} parent=5 // pred_fallthru
        _
      %p152 = scmp.lt.s32.totalorder %s15, 2
      // Predicated region
      $region13: #{tpu_custom_call.1} parent=5 // pred_check
        %p153 = pneg %p152
      $region14: #{tpu_custom_call.1} parent=5 // pred_check_branch
        %155 = sbr.rel (%p153) target = $region16
      $region15: #{tpu_custom_call.1} parent=5 // pred_region
        // Predicated region
        $region17: #{tpu_custom_call.1} parent=15 // pred_check
          %p156 = pneg %p49
        $region18: #{tpu_custom_call.1} parent=15 // pred_check_branch
          %158 = sbr.rel (%p156) target = $region20
        $region19: #{tpu_custom_call.1} parent=15 // pred_region
          %p159 = scmp.lt.s32.totalorder %s22, 0
          %s160 = scalar_select %p159, %s22, 0
          %p161 = scmp.lt.s32.totalorder %s23, 1
          %s162 = scalar_select %p161, %s23, 1
          %s163 = smul.addr %s160, 2
          %s164 = sadd.s32 %s162, %s163
          %s165 = smul.addr %s164, 8
          %s166 = scalar_lea.vmem %s0, %s165
        $region20: #{tpu_custom_call.1} parent=15 // pred_fallthru
          _
        // Predicated region
        $region21: #{tpu_custom_call.1} parent=15 // pred_check
          %p167 = pneg %p75
        $region22: #{tpu_custom_call.1} parent=15 // pred_check_branch
          %169 = sbr.rel (%p167) target = $region24
        $region23: #{tpu_custom_call.1} parent=15 // pred_region
          %s170 = sand.u32 %s65, 1
          %s171 = scalar_lea.sflag [#allocation3], %s170
          %s172 = sand.u32 %s65, 1
          %s173 = smul.addr %s172, 8
          %s174 = scalar_lea.vmem [#allocation2], %s173
          %s176 = ssub.s32 128, 128
          %177 = vsyncadd %s171, %s176
          %s178 = smul.addr %s23, 128
          %s179 = scalar_lea.hbm %s1, %s178
          %s181 = sshll.u32 %s174, 4
          %s182 = int_to_ptr.vmem [resolvable:$true] %s181
          %184 = dma.hbm_to_vmem [thread:$0]  %s179, 128, %s182, %s171
        $region24: #{tpu_custom_call.1} parent=15 // pred_fallthru
          _
        // Predicated region
        $region25: #{tpu_custom_call.1} parent=15 // pred_check
          %p185 = pneg %p103
        $region26: #{tpu_custom_call.1} parent=15 // pred_check_branch
          %187 = sbr.rel (%p185) target = $region28
        $region27: #{tpu_custom_call.1} parent=15 // pred_region
          %p188 = scmp.lt.s32.totalorder %s23, 1
          %s189 = scalar_select %p188, %s23, 1
          %p190 = scmp.lt.s32.totalorder %s22, 0
          %s191 = scalar_select %p190, %s22, 0
          %s192 = sadd.s32 %s191, %s189
          %s193 = smul.addr %s192, 8
          %s194 = scalar_lea.vmem %s2, %s193
        $region28: #{tpu_custom_call.1} parent=15 // pred_fallthru
          _
      $region16: #{tpu_custom_call.1} parent=5 // pred_fallthru
        _
      %p195 = scmp.le.s32.totalorder 1, %s15
      %p196 = scmp.lt.s32.totalorder %s15, 3
      %p197 = pnand %p195, %p196
      %p198 = pneg %p197
      // Predicated region
      $region29: #{tpu_custom_call.1} parent=5 // pred_check
        _
      $region30: #{tpu_custom_call.1} parent=5 // pred_check_branch
        %200 = sbr.rel (%p197) target = $region32
      $region31: #{tpu_custom_call.1} parent=5 // pred_region
        %s201 = ssub.s32 %s15, 1
        %s202 = sand.u32 %s68, 1
        %s203 = scalar_lea.sflag [#allocation3], %s202
        %s204 = sand.u32 %s68, 1
        %s205 = smul.addr %s204, 8
        %s206 = scalar_lea.vmem [#allocation2], %s205
        // Predicated region
        $region33: #{tpu_custom_call.1} parent=31 // pred_check
          %p207 = pneg %p81
        $region34: #{tpu_custom_call.1} parent=31 // pred_check_branch
          %209 = sbr.rel (%p207) target = $region36
        $region35: #{tpu_custom_call.1} parent=31 // pred_region
          %210 = dma.done %s203, 128
        $region36: #{tpu_custom_call.1} parent=31 // pred_fallthru
          _
        %p211 = scmp.lt.s32.totalorder %s24, 0
        %s212 = scalar_select %p211, %s24, 0
        %p213 = scmp.lt.s32.totalorder %s25, 1
        %s214 = scalar_select %p213, %s25, 1
        %s215 = smul.addr %s212, 2
        %s216 = sadd.s32 %s214, %s215
        %s217 = smul.addr %s216, 8
        %s218 = scalar_lea.vmem %s0, %s217
        %p219 = pneg %p55
        %p220 = pneg %p52
        %s221 = sand.u32 %s68, 1
        %s222 = scalar_lea.sflag [#allocation3], %s221
        %s223 = sand.u32 %s68, 1
        %s224 = smul.addr %s223, 8
        %s225 = scalar_lea.vmem [#allocation2], %s224
        %p226 = pneg %p81
        %p227 = pneg %p78
        %p228 = scmp.lt.s32.totalorder %s25, 1
        %s229 = scalar_select %p228, %s25, 1
        %p230 = scmp.lt.s32.totalorder %s24, 0
        %s231 = scalar_select %p230, %s24, 0
        %s232 = sadd.s32 %s231, %s229
        %s233 = smul.addr %s232, 8
        %s234 = scalar_lea.vmem %s2, %s233
        %p235 = pneg %p109
        %p236 = pneg %p106
        %p237 = pneg %p137
        %p238 = pneg %p134
        %s239 = sand.u32 %s124, 1
        %s240 = scalar_lea.sflag [#allocation4], %s239
        %s241 = sand.u32 %s124, 1
        %s242 = smul.addr %s241, 8
        %s243 = scalar_lea.vmem [#allocation5], %s242
        %p244 = scmp.lt.s32.totalorder %s24, 0
        %s245 = scalar_select %p244, %s24, 0
        %p246 = scmp.lt.s32.totalorder %s25, 1
        %s247 = scalar_select %p246, %s25, 1
        %s248 = smul.addr %s245, 2
        %s249 = sadd.s32 %s247, %s248
        %s250 = smul.addr %s249, 8
        %s251 = scalar_lea.vmem %s0, %s250
        %p252 = scmp.lt.s32.totalorder %s25, 1
        %s253 = scalar_select %p252, %s25, 1
        %p254 = scmp.lt.s32.totalorder %s24, 0
        %s255 = scalar_select %p254, %s24, 0
        %s256 = sadd.s32 %s255, %s253
        %s257 = smul.addr %s256, 8
        %s258 = scalar_lea.vmem %s2, %s257
        %v259 = vld [vmem:[%s251] sm:$0xff]
        %v260 = vld [vmem:[%s206] sm:$0xff]
        %v261 = vld [vmem:[%s258] sm:$0xff]
        %263 = vset.pattern.permute.xlu0 0
        %264 = vperm.xlu0 %263, %v261
        %v265 = vpop.permute.xlu0 %264
        %267 = vset.pattern.permute.xlu0 1
        %268 = vperm.xlu0 %267, %v261
        %v269 = vpop.permute.xlu0 %268
        %v271 = vlaneseq
        %v272 = vand.u32 %v271, 127
        %vm273 = vcmp.eq.s32.totalorder %v272, 0
        %274 = vrot.lane.b32.xlu0 %v259, 1
        %v275 = vpop.permute.xlu0 %274
        %v276 = vsel %vm273, %v265, %v275
        %vm277 = vcmp.eq.s32.totalorder %v272, 127
        %278 = vrot.lane.b32.xlu0 %v259, 127
        %v279 = vpop.permute.xlu0 %278
        %v280 = vsel %vm277, %v269, %v279
        %v281 = vlaneseq
        %v282 = vshrl.u32 %v281, 7
        %v283 = vsub.s32 0, %v282
        %v284 = vrot.slane %v260, %v283
        %v285 = vmul.f32 %v284, %v276
        %v286 = vlaneseq
        %v287 = vshrl.u32 %v286, 7
        %v288 = vsub.s32 1, %v287
        %v289 = vrot.slane %v260, %v288
        %v290 = vmul.f32 %v289, %v259
        %v291 = vadd.f32 %v285, %v290
        %v292 = vlaneseq
        %v293 = vshrl.u32 %v292, 7
        %v294 = vsub.s32 2, %v293
        %v295 = vrot.slane %v260, %v294
        %v296 = vmul.f32 %v295, %v280
        %v297 = vadd.f32 %v291, %v296
        %v298 = vlaneseq
        %v299 = vshrl.u32 %v298, 7
        %v300 = vsub.s32 3, %v299
        %v301 = vrot.slane %v260, %v300
        %v302 = vmul.f32 %v301, %v276
        %v303 = vlaneseq
        %v304 = vshrl.u32 %v303, 7
        %v305 = vsub.s32 4, %v304
        %v306 = vrot.slane %v260, %v305
        %v307 = vmul.f32 %v306, %v259
        %v308 = vadd.f32 %v302, %v307
        %v309 = vlaneseq
        %v310 = vshrl.u32 %v309, 7
        %v311 = vsub.s32 5, %v310
        %v312 = vrot.slane %v260, %v311
        %v313 = vmul.f32 %v312, %v280
        %v314 = vadd.f32 %v308, %v313
        %v315 = vadd.f32 %v259, 0.5
        %v316 = vsub.f32 0.0, %v315
        %v317 = vmul.f32 %v316, %v297
        %v318 = vadd.f32 %v317, %v314
        %319 = vst [vmem:[%s243] sm:$0xff] %v318
        %s320 = sand.u32 %s124, 1
        %s321 = scalar_lea.sflag [#allocation4], %s320
        %s322 = sand.u32 %s124, 1
        %s323 = smul.addr %s322, 8
        %s324 = scalar_lea.vmem [#allocation5], %s323
        // Predicated region
        $region37: #{tpu_custom_call.1} parent=31 // pred_check
          %p325 = pneg %p134
        $region38: #{tpu_custom_call.1} parent=31 // pred_check_branch
          %327 = sbr.rel (%p325) target = $region40
        $region39: #{tpu_custom_call.1} parent=31 // pred_region
          %s329 = ssub.s32 128, 128
          %330 = vsyncadd %s321, %s329
          %s331 = smul.addr %s24, 2
          %s332 = sadd.s32 %s25, %s331
          %s333 = smul.addr %s332, 128
          %s334 = scalar_lea.hbm %s3, %s333
          %s336 = sshll.u32 %s324, 4
          %s337 = int_to_ptr.vmem [resolvable:$true] %s336
          %339 = dma.vmem_to_hbm [thread:$0]  %s337, 128, %s334, %s321
        $region40: #{tpu_custom_call.1} parent=31 // pred_fallthru
          _
      $region32: #{tpu_custom_call.1} parent=5 // pred_fallthru
        _
      %p340 = scmp.le.s32.totalorder 2, %s15
      // Predicated region
      $region41: #{tpu_custom_call.1} parent=5 // pred_check
        %p341 = pneg %p340
      $region42: #{tpu_custom_call.1} parent=5 // pred_check_branch
        %343 = sbr.rel (%p341) target = $region44
      $region43: #{tpu_custom_call.1} parent=5 // pred_region
        %s344 = ssub.s32 %s15, 2
        // Predicated region
        $region45: #{tpu_custom_call.1} parent=43 // pred_check
          %p345 = pneg %p140
        $region46: #{tpu_custom_call.1} parent=43 // pred_check_branch
          %347 = sbr.rel (%p345) target = $region48
        $region47: #{tpu_custom_call.1} parent=43 // pred_region
          %s348 = sand.u32 %s125, 1
          %s349 = scalar_lea.sflag [#allocation4], %s348
          %s350 = sand.u32 %s125, 1
          %s351 = smul.addr %s350, 8
          %s352 = scalar_lea.vmem [#allocation5], %s351
          %353 = dma.done %s349, 128
        $region48: #{tpu_custom_call.1} parent=43 // pred_fallthru
          _
      $region44: #{tpu_custom_call.1} parent=5 // pred_fallthru
        _
    $region6: #{tpu_custom_call.1} parent=1 // loop_footer
      %s19 = sadd.s32 1, %s15
    $region7: #{tpu_custom_call.1} parent=1 // loop_footer_branch
      %14 = sbr.rel target = $region3
    $region8: #{tpu_custom_call.1} parent=1 // loop_exit
      _
    %354 = vsyncpa [#allocation3], 1
    %s355 = scalar_lea.sflag [#allocation3], 1
    %356 = vsyncpa %s355, 1
    %357 = vsyncpa [#allocation4], 1
    %s358 = scalar_lea.sflag [#allocation4], 1
    %359 = vsyncpa %s358, 1

</llo_original>
